<compile_context>
chip_gen: v6e
topology: v6e:2x2x1
jax: 0.10.0
libtpu: 0.0.40
codegen_flags: <defaults>
</compile_context>

<pallas_src>
import jax
import jax.numpy as jnp
from jax.experimental import pallas as pl
from jax.experimental.pallas import tpu as pltpu

F = 10                     # every Linear is 10 -> 10
MID_F = 6 * F              # 60: concat of the six middle branches
OUT_F = 6 * F + F // 2     # 65: cat([x2..x6, x7, x8])
LANES = 128                # stage-3 output padded to a full vreg lane width

# Row offsets inside the packed constant slab (all matmul operands start at lane 0).
W1_ROW, B1_ROW = 0, 10
WCAT_ROW, BCAT_ROW = 16, 26
WBLK_ROW, BBLK_ROW = 32, 92
SLAB_ROWS = 96             # multiple of 8

# Row tiling.  Real VMEM footprint is ~4-6 KB/row (lane-padded in/out blocks,
# double buffers, h/u/y compiler temps) -> TM=4096 is ~20-25 MiB: fits v7x's
# 64 MiB VMEM and is explicitly allowed past v5e's 16 MiB default scoped limit.
TM_MAX = 4096
TM_MIN = 512               # don't split tiles smaller than this just for megacore
VMEM_LIMIT_BYTES = 48 * 1024 * 1024

# Indices into the stacked weight/bias tensors (order of definition in __init__).
G1, G2, G3, G4, G5, G6, G7, G8, G9, G10, GJ, GQ, GK, GA = range(14)


def _round_up(n, m):
    return (n + m - 1) // m * m


def _pick_tm(M):
    """Row tile: big enough to amortize the ~0.35us per-grid-step overhead,
    small enough for VMEM, and split so both v7x TensorCores get work."""
    n_tiles = pl.cdiv(M, TM_MAX)
    if M >= 2 * TM_MIN:
        n_tiles = max(n_tiles, 2)          # keep the second TC fed
    tm = _round_up(pl.cdiv(M, n_tiles), 8)
    return max(8, min(tm, TM_MAX))


def _mlp_kernel(x_ref, slab_ref, o_ref):
    """Fused forward of MyModel for one (TM, 10) tile of rows.

    x_ref:    (TM, 10)        activations
    slab_ref: (96, 128)       packed constants:
                              [0:10,0:10]=W1, [10,0:10]=b1,
                              [16:26,0:60]=Wcat, [26,0:60]=bcat,
                              [32:92,0:128]=Wblk, [92,0:128]=bblk
    o_ref:    (TM, 65)        concatenated output
    """
    x = x_ref[...]

    w1 = slab_ref[W1_ROW:W1_ROW + F, 0:F]
    b1 = slab_ref[B1_ROW:B1_ROW + 1, 0:F]
    wcat = slab_ref[WCAT_ROW:WCAT_ROW + F, 0:MID_F]
    bcat = slab_ref[BCAT_ROW:BCAT_ROW + 1, 0:MID_F]
    wblk = slab_ref[WBLK_ROW:WBLK_ROW + MID_F, :]
    bblk = slab_ref[BBLK_ROW:BBLK_ROW + 1, :]

    # x = relu(gemm_1(x))
    h = jnp.maximum(
        jnp.dot(x, w1, preferred_element_type=jnp.float32) + b1, 0.0)

    # all six middle branches (gemm_2..gemm_6, gemm_Q) + relu in one matmul
    u = jnp.maximum(
        jnp.dot(h, wcat, preferred_element_type=jnp.float32) + bcat, 0.0)

    # second-level branches (gemm_7..gemm_10, gemm_J, gemm_K) + pooled-K columns
    # y lanes: 0..49 = x2..x6, 50..59 = x7, 60..64 = x7 even, 65..69 = x7 odd, 70..127 = 0
    y = jnp.dot(u, wblk, preferred_element_type=jnp.float32) + bblk     # (TM, 128)

    # max_pool1d(k=2): lane-roll by -5 (written as +123 mod 128) brings the odd
    # columns under the even ones; one VPU max + lane-masked select replaces the
    # old slice + concatenate epilogue.
    rolled = pltpu.roll(y, shift=LANES - F // 2, axis=1)   # == jnp.roll(y, -5, axis=1)
    pooled = jnp.maximum(y, rolled)
    lane = jax.lax.broadcasted_iota(jnp.int32, (1, LANES), 1)
    merged = jnp.where(lane < MID_F, y, pooled)

    # single contiguous (TM, 65) store
    o_ref[...] = merged[:, :OUT_F]


def init_params(key):
    """Deterministic init mimicking torch.nn.Linear default U(-1/sqrt(in), 1/sqrt(in))."""
    bound = 1.0 / jnp.sqrt(jnp.float32(F))
    kw, kb = jax.random.split(key)
    # torch Linear stores weight as (out, in); keep that layout here.
    w = jax.random.uniform(kw, (14, F, F), jnp.float32, -bound, bound)
    b = jax.random.uniform(kb, (14, F), jnp.float32, -bound, bound)
    return w, b


def prepare_fused_params(w, b):
    """Pack all fused weights/biases into one (96, 128) constant slab (built once)."""
    w = jnp.asarray(w, jnp.float32)
    b = jnp.asarray(b, jnp.float32)

    slab = jnp.zeros((SLAB_ROWS, LANES), jnp.float32)

    # stage 1
    slab = slab.at[W1_ROW:W1_ROW + F, 0:F].set(w[G1].T)
    slab = slab.at[B1_ROW, 0:F].set(b[G1])

    # stage 2: six middle-branch weights concatenated along the output dim
    mid = [G2, G3, G4, G5, G6, GQ]
    wcat = jnp.concatenate([w[i].T for i in mid], axis=1)               # (10, 60)
    bcat = jnp.concatenate([b[i] for i in mid])                         # (60,)
    slab = slab.at[WCAT_ROW:WCAT_ROW + F, 0:MID_F].set(wcat)
    slab = slab.at[BCAT_ROW, 0:MID_F].set(bcat)

    # stage 3: block-diagonal second-level weights + pooled-WK columns, 128 lanes wide
    out_br = [G7, G8, G9, G10, GJ, GK]
    wblk = jnp.zeros((MID_F, LANES), jnp.float32)
    for k, i in enumerate(out_br):
        wblk = wblk.at[k * F:(k + 1) * F, k * F:(k + 1) * F].set(w[i].T)

    rows = jnp.arange(F)[:, None]
    cols = jnp.arange(F // 2)[None, :]
    sel_even = (rows == 2 * cols).astype(jnp.float32)                   # (10, 5)
    sel_odd = (rows == 2 * cols + 1).astype(jnp.float32)                # (10, 5)
    wk_t = w[GK].T                                                      # (10, 10)
    wblk = wblk.at[5 * F:6 * F, 6 * F:6 * F + F // 2].set(wk_t @ sel_even)
    wblk = wblk.at[5 * F:6 * F, 6 * F + F // 2:7 * F].set(wk_t @ sel_odd)
    slab = slab.at[WBLK_ROW:WBLK_ROW + MID_F, :].set(wblk)

    bblk = jnp.zeros((LANES,), jnp.float32)
    bblk = bblk.at[0:MID_F].set(jnp.concatenate([b[i] for i in out_br]))
    bblk = bblk.at[6 * F:6 * F + F // 2].set(b[GK] @ sel_even)
    bblk = bblk.at[6 * F + F // 2:7 * F].set(b[GK] @ sel_odd)
    slab = slab.at[BBLK_ROW, :].set(bblk)

    return slab


@jax.jit
def my_model_forward(x, slab):
    """x: (..., 10) float32 -> (..., 65) float32."""
    *lead, fin = x.shape
    assert fin == F
    M = 1
    for d in lead:
        M *= d
    x2d = x.reshape(M, F)

    tm = _pick_tm(M)
    grid = (pl.cdiv(M, tm),)      # no padding: boundary blocks are masked by Pallas

    out = pl.pallas_call(
        _mlp_kernel,
        out_shape=jax.ShapeDtypeStruct((M, OUT_F), jnp.float32),
        grid=grid,
        in_specs=[
            pl.BlockSpec((tm, F), lambda i: (i, 0)),            # activation row tile
            pl.BlockSpec((SLAB_ROWS, LANES), lambda i: (0, 0)),  # constants stay resident
        ],
        out_specs=pl.BlockSpec((tm, OUT_F), lambda i: (i, 0)),
        compiler_params=pltpu.CompilerParams(
            dimension_semantics=("parallel",),
            vmem_limit_bytes=VMEM_LIMIT_BYTES),
    )(x2d, slab)

    return out.reshape(*lead, OUT_F)


def reference_forward(x, w, b):
    """Pure-JAX reference mirroring the PyTorch module."""
    def lin(v, i):
        return v @ w[i].T + b[i]

    h = jax.nn.relu(lin(x, G1))
    x2 = lin(jax.nn.relu(lin(h, G2)), G7)
    x3 = lin(jax.nn.relu(lin(h, G3)), G8)
    x4 = lin(jax.nn.relu(lin(h, G4)), G9)
    x5 = lin(jax.nn.relu(lin(h, G5)), G10)
    x6 = lin(jax.nn.relu(lin(h, G6)), GJ)
    x7 = lin(jax.nn.relu(lin(h, GQ)), GK)
    x8 = jnp.max(x7.reshape(*x7.shape[:-1], F // 2, 2), axis=-1)
    return jnp.concatenate([x2, x3, x4, x5, x6, x7, x8], axis=-1)


if __name__ == "__main__":
    key = jax.random.PRNGKey(0)
    kx, kp, kx2 = jax.random.split(key, 3)

    w, b = init_params(kp)
    slab = prepare_fused_params(w, b)       # built once, outside the jitted forward

    # Small shape implied by the module (feature dim = 10).
    B, C = 2, 4
    x = jax.random.normal(kx, (B, C, F), jnp.float32)
    out = jax.block_until_ready(my_model_forward(x, slab))
    ref = reference_forward(x, w, b)
    assert out.shape == (B, C, OUT_F), out.shape
    assert jnp.allclose(out, ref, atol=1e-5, rtol=1e-5), float(jnp.abs(out - ref).max())

    # Row count not divisible by the tile: exercises boundary-block masking and the
    # >=2-tile grid (megacore) path.
    x2 = jax.random.normal(kx2, (3, 347, F), jnp.float32)
    out2 = jax.block_until_ready(my_model_forward(x2, slab))
    ref2 = reference_forward(x2, w, b)
    assert out2.shape == (3, 347, OUT_F), out2.shape
    assert jnp.allclose(out2, ref2, atol=1e-5, rtol=1e-5), float(jnp.abs(out2 - ref2).max())

    print("KERNEL_OK")
</pallas_src>

<mosaic_0001>
module attributes {stable_mosaic.version = 11 : i64} {
  func.func @_mlp_kernel(%arg0: i32, %arg1: memref<8x10xf32, #tpu.memory_space<vmem>>, %arg2: memref<96x128xf32, #tpu.memory_space<vmem>>, %arg3: memref<8x65xf32, #tpu.memory_space<vmem>>) attributes {dimension_semantics = [#tpu.dimension_semantics<parallel>], iteration_bounds = array<i64: 1>, scalar_prefetch = 0 : i64, scratch_operands = 0 : i64, tpu.core_type = #tpu.core_type<tc>, window_params = [{transform_indices = @transform_0, window_bounds = array<i64: 8, 10>}, {pipeline_mode = #tpu.pipeline_mode<synchronous>, transform_indices = @transform_1, window_bounds = array<i64: 96, 128>}, {transform_indices = @transform_2, window_bounds = array<i64: 8, 65>}]} {
    %c0 = arith.constant 0 : index
    %c0_0 = arith.constant 0 : index
    %0 = vector.load %arg1[%c0, %c0_0] : memref<8x10xf32, #tpu.memory_space<vmem>>, vector<8x10xf32>
    %c0_1 = arith.constant 0 : index
    %c0_2 = arith.constant 0 : index
    %1 = vector.load %arg2[%c0_1, %c0_2] : memref<96x128xf32, #tpu.memory_space<vmem>>, vector<10x10xf32>
    %c10 = arith.constant 10 : index
    %c0_3 = arith.constant 0 : index
    %2 = vector.load %arg2[%c10, %c0_3] : memref<96x128xf32, #tpu.memory_space<vmem>>, vector<1x10xf32>
    %c16 = arith.constant 16 : index
    %c0_4 = arith.constant 0 : index
    %3 = vector.load %arg2[%c16, %c0_4] : memref<96x128xf32, #tpu.memory_space<vmem>>, vector<10x60xf32>
    %c26 = arith.constant 26 : index
    %c0_5 = arith.constant 0 : index
    %4 = vector.load %arg2[%c26, %c0_5] : memref<96x128xf32, #tpu.memory_space<vmem>>, vector<1x60xf32>
    %c32 = arith.constant 32 : index
    %c0_6 = arith.constant 0 : index
    %5 = vector.load %arg2[%c32, %c0_6] : memref<96x128xf32, #tpu.memory_space<vmem>>, vector<60x128xf32>
    %c92 = arith.constant 92 : index
    %c0_7 = arith.constant 0 : index
    %6 = vector.load %arg2[%c92, %c0_7] : memref<96x128xf32, #tpu.memory_space<vmem>>, vector<1x128xf32>
    %cst = arith.constant dense<0.000000e+00> : vector<8x10xf32>
    %7 = tpu.matmul %0, %1, %cst {dimension_numbers = #tpu.dot_dimension_numbers<[1], [0], [0], [1], [0, 0, 1, 1], [], []>} : vector<8x10xf32>, vector<10x10xf32>, vector<8x10xf32> -> vector<8x10xf32>
    %8 = vector.broadcast %2 : vector<1x10xf32> to vector<8x10xf32>
    %9 = arith.addf %7, %8 : vector<8x10xf32>
    %cst_8 = arith.constant 0.000000e+00 : f32
    %10 = vector.broadcast %cst_8 : f32 to vector<8x10xf32>
    %11 = arith.maximumf %9, %10 : vector<8x10xf32>
    %cst_9 = arith.constant dense<0.000000e+00> : vector<8x60xf32>
    %12 = tpu.matmul %11, %3, %cst_9 {dimension_numbers = #tpu.dot_dimension_numbers<[1], [0], [0], [1], [0, 0, 1, 1], [], []>} : vector<8x10xf32>, vector<10x60xf32>, vector<8x60xf32> -> vector<8x60xf32>
    %13 = vector.broadcast %4 : vector<1x60xf32> to vector<8x60xf32>
    %14 = arith.addf %12, %13 : vector<8x60xf32>
    %cst_10 = arith.constant 0.000000e+00 : f32
    %15 = vector.broadcast %cst_10 : f32 to vector<8x60xf32>
    %16 = arith.maximumf %14, %15 : vector<8x60xf32>
    %cst_11 = arith.constant dense<0.000000e+00> : vector<8x128xf32>
    %17 = tpu.matmul %16, %5, %cst_11 {dimension_numbers = #tpu.dot_dimension_numbers<[1], [0], [0], [1], [0, 0, 1, 1], [], []>} : vector<8x60xf32>, vector<60x128xf32>, vector<8x128xf32> -> vector<8x128xf32>
    %18 = vector.broadcast %6 : vector<1x128xf32> to vector<8x128xf32>
    %19 = arith.addf %17, %18 : vector<8x128xf32>
    %c123_i32 = arith.constant 123 : i32
    %20 = tpu.dynamic_rotate %19 by %c123_i32 dim 1 : vector<8x128xf32>, i32 -> vector<8x128xf32>
    %21 = arith.maximumf %19, %20 : vector<8x128xf32>
    %22 = tpu.iota {dimensions = array<i32: 1>} : vector<1x128xi32>
    %c60_i32 = arith.constant 60 : i32
    %23 = vector.broadcast %c60_i32 : i32 to vector<1x128xi32>
    %24 = arith.cmpi slt, %22, %23 : vector<1x128xi32>
    %25 = vector.shape_cast %24 : vector<1x128xi1> to vector<1x128xi1>
    %26 = vector.broadcast %25 : vector<1x128xi1> to vector<8x128xi1>
    %27 = arith.select %26, %19, %21 : vector<8x128xi1>, vector<8x128xf32>
    %28 = vector.extract_strided_slice %27 {offsets = [0, 0], sizes = [8, 65], strides = [1, 1]} : vector<8x128xf32> to vector<8x65xf32>
    %c0_12 = arith.constant 0 : index
    %c0_13 = arith.constant 0 : index
    %29 = vector.load %arg3[%c0_12, %c0_13] : memref<8x65xf32, #tpu.memory_space<vmem>>, vector<8x65xf32>
    tpu.vector_store %arg3[%c0_12, %c0_13], %28 {strides = array<i32>} : memref<8x65xf32, #tpu.memory_space<vmem>>, vector<8x65xf32>,
    return
  }
  func.func @transform_0(%arg0: i32) -> (i32, i32) {
    %c0_i32 = arith.constant 0 : i32
    %c0_i32_0 = arith.constant 0 : i32
    return %arg0, %c0_i32 : i32, i32
  }
  func.func @transform_1(%arg0: i32) -> (i32, i32) {
    %c0_i32 = arith.constant 0 : i32
    %c0_i32_0 = arith.constant 0 : i32
    %c0_i32_1 = arith.constant 0 : i32
    return %c0_i32, %c0_i32_0 : i32, i32
  }
  func.func @transform_2(%arg0: i32) -> (i32, i32) {
    %c0_i32 = arith.constant 0 : i32
    %c0_i32_0 = arith.constant 0 : i32
    return %arg0, %c0_i32 : i32, i32
  }
}

</mosaic_0001>

<llo_original>
// kernel: my_model_forward.1
$region0: #{my_model_forward.1}
  #allocation0 [shape = 'u32[]', space=smem, size = 0x4, offset = 0x4, fixed_abs, tag = 'smem constant byte address 0x4 - core index']
  #allocation1 [shape = 'u32[144,128]{1,0:T(1,128)}', space=vmem, size = 0x12000, scoped, tag = 'internal scratch']
  %s0 = inlined_call_operand.hbm [shape: f32[8,10], index: 0, kind: input, shape index: {}]
  %s1 = inlined_call_operand.hbm [shape: f32[96,128], index: 1, kind: input, shape index: {}]
  %s2 = inlined_call_operand.hbm [shape: f32[8,65], index: 2, kind: output, shape index: {}]
  %s3 = sld [smem:[#allocation0]]
  $region26: #{my_model_forward.1} parent=0
    _
  %s5 = ssub.s32 1, %s3
  %s6 = scalar_select 0, %s5, %s3
  $region1: #{my_model_forward.1} parent=0
    #allocation2 [shape = 'u8[4096]{0}', space=vmem, size = 0x1000, scoped, tag = 'input window, operand 0, single buffered']
    #allocation3 [shape = 's32[1]{0}', space=sflag, size = 0x4, scoped, tag = 'scoped memory for my_model_forward.1']
    #allocation4 [shape = 's32[1]{0}', space=sflag, size = 0x4, scoped, tag = 'scoped memory for my_model_forward.1']
    #allocation5 [shape = 'u8[49152]{0}', space=vmem, size = 0xc000, scoped, tag = 'input window, operand 1, single buffered']
    #allocation6 [shape = 's32[1]{0}', space=sflag, size = 0x4, scoped, tag = 'scoped memory for my_model_forward.1']
    #allocation7 [shape = 'u8[4096]{0}', space=vmem, size = 0x1000, scoped, tag = 'output window, operand 0, single buffered']
    %7 = vsyncpa [#allocation3], 0
    %8 = vsyncpa [#allocation6], 0
    %9 = vsyncpa [#allocation4], 0
    // Predicated region
    $region2: #{my_model_forward.1} parent=1 // pred_check
      _
    $region3: #{my_model_forward.1} parent=1 // pred_check_branch
      %11 = sbr.rel (0) target = $region5
    $region4: #{my_model_forward.1} parent=1 // pred_region
      %s13 = ssub.s32 128, 128
      %14 = vsyncadd [#allocation3], %s13
      %s16 = sshll.u32 [#allocation2], 4
      %s17 = int_to_ptr.vmem [resolvable:$true] %s16
      %19 = dma.hbm_to_vmem [thread:$0]  %s0, 128, %s17, [#allocation3]
    $region5: #{my_model_forward.1} parent=1 // pred_fallthru
      _
    // Predicated region
    $region6: #{my_model_forward.1} parent=1 // pred_check
      _
    $region7: #{my_model_forward.1} parent=1 // pred_check_branch
      %21 = sbr.rel (0) target = $region9
    $region8: #{my_model_forward.1} parent=1 // pred_region
      %s23 = ssub.s32 1536, 1536
      %24 = vsyncadd [#allocation6], %s23
      %s25 = sshll.u32 [#allocation5], 4
      %s26 = int_to_ptr.vmem [resolvable:$true] %s25
      %31 = dma.hbm_to_vmem [thread:$0]  %s1, 1536, %s26, [#allocation6], 128, 128, 8
    $region9: #{my_model_forward.1} parent=1 // pred_fallthru
      _
    // Predicated region
    $region10: #{my_model_forward.1} parent=1 // pred_check
      _
    $region11: #{my_model_forward.1} parent=1 // pred_check_branch
      %33 = sbr.rel (0) target = $region13
    $region12: #{my_model_forward.1} parent=1 // pred_region
      %34 = dma.done [#allocation3], 128
    $region13: #{my_model_forward.1} parent=1 // pred_fallthru
      _
    // Predicated region
    $region14: #{my_model_forward.1} parent=1 // pred_check
      _
    $region15: #{my_model_forward.1} parent=1 // pred_check_branch
      %36 = sbr.rel (0) target = $region17
    $region16: #{my_model_forward.1} parent=1 // pred_region
      %37 = dma.done [#allocation6], 1536
    $region17: #{my_model_forward.1} parent=1 // pred_fallthru
      _
    %v38 = vld [vmem:[#allocation2] sm:$0xff]
    %v39 = vld [vmem:[#allocation5] sm:$0xff]
    %v40 = vld [vmem:[#allocation5 + $0x8] sm:$0x3]
    %v41 = vld [vmem:[#allocation5 + $0xa] sm:$0x1]
    %v42 = vld [vmem:[#allocation5 + $0x10] sm:$0xff]
    %v43 = vld [vmem:[#allocation5 + $0x18] sm:$0x3]
    %v44 = vld [vmem:[#allocation5 + $0x1a] sm:$0x1]
    %v45 = vld [vmem:[#allocation5 + $0x20] sm:$0xff]
    %v46 = vld [vmem:[#allocation5 + $0x28] sm:$0xff]
    %v47 = vld [vmem:[#allocation5 + $0x30] sm:$0xff]
    %v48 = vld [vmem:[#allocation5 + $0x38] sm:$0xff]
    %v49 = vld [vmem:[#allocation5 + $0x40] sm:$0xff]
    %v50 = vld [vmem:[#allocation5 + $0x48] sm:$0xff]
    %v51 = vld [vmem:[#allocation5 + $0x50] sm:$0xff]
    %v52 = vld [vmem:[#allocation5 + $0x58] sm:$0xf]
    %v53 = vld [vmem:[#allocation5 + $0x5c] sm:$0x1]
    %v54 = vlaneseq
    %v55 = vshrl.u32 %v54, 7
    %v56 = vsub.s32 0, %v55
    %v57 = vrot.slane %v41, %v56
    %vm58 = vcmask 80896
    %v60 = vsel %vm58, %v38, 0
    %vm62 = vcmask 1041408
    %v64 = vsel %vm62, %v40, 0
    %66 = vmatprep.subr.mxu0 0.0
    %67 = vmatpush1.msra.mxu0 0.0
    %68 = vmatprep.subr.mxu0 0.0
    %69 = vmatpush1.msra.mxu0 0.0
    %70 = vmatprep.subr.mxu0 0.0
    %71 = vmatpush1.msra.mxu0 0.0
    %72 = vmatprep.subr.mxu0 0.0
    %73 = vmatpush1.msra.mxu0 0.0
    %74 = vmatprep.subr.mxu0 0.0
    %75 = vmatpush1.msra.mxu0 0.0
    %76 = vmatprep.subr.mxu0 0.0
    %77 = vmatpush1.msra.mxu0 0.0
    %78 = vmatprep.subr.mxu0 0.0
    %79 = vmatpush1.msra.mxu0 0.0
    %80 = vmatprep.subr.mxu0 0.0
    %81 = vmatpush1.msra.mxu0 0.0
    %82 = vmatprep.subr.mxu0 0.0
    %83 = vmatpush1.msra.mxu0 0.0
    %84 = vmatprep.subr.mxu0 0.0
    %85 = vmatpush1.msra.mxu0 0.0
    %86 = vmatprep.subr.mxu0 0.0
    %87 = vmatpush1.msra.mxu0 0.0
    %88 = vmatprep.subr.mxu0 0.0
    %89 = vmatpush1.msra.mxu0 0.0
    %90 = vmatprep.subr.mxu0 0.0
    %91 = vmatpush1.msra.mxu0 0.0
    %92 = vmatprep.subr.mxu0 0.0
    %93 = vmatpush1.msra.mxu0 0.0
    %94 = vmatprep.subr.mxu0 0.0
    %95 = vmatpush1.msra.mxu0 %v64
    %96 = vmatprep.subr.mxu0 0.0
    %97 = vmatpush1.msra.mxu0 %v39
    %98 = vmatprep.subr.mxu0 0.0
    %99 = vmatpush2.msra.mxu0 0.0
    %100 = vmatprep.subr.mxu0 0.0
    %101 = vmatpush2.msra.mxu0 0.0
    %102 = vmatprep.subr.mxu0 0.0
    %103 = vmatpush2.msra.mxu0 0.0
    %104 = vmatprep.subr.mxu0 0.0
    %105 = vmatpush2.msra.mxu0 0.0
    %106 = vmatprep.subr.mxu0 0.0
    %107 = vmatpush2.msra.mxu0 0.0
    %108 = vmatprep.subr.mxu0 0.0
    %109 = vmatpush2.msra.mxu0 0.0
    %110 = vmatprep.subr.mxu0 0.0
    %111 = vmatpush2.msra.mxu0 0.0
    %112 = vmatprep.subr.mxu0 0.0
    %113 = vmatpush2.msra.mxu0 0.0
    %114 = vmatprep.subr.mxu0 0.0
    %115 = vmatpush2.msra.mxu0 0.0
    %116 = vmatprep.subr.mxu0 0.0
    %117 = vmatpush2.msra.mxu0 0.0
    %118 = vmatprep.subr.mxu0 0.0
    %119 = vmatpush2.msra.mxu0 0.0
    %120 = vmatprep.subr.mxu0 0.0
    %121 = vmatpush2.msra.mxu0 0.0
    %122 = vmatprep.subr.mxu0 0.0
    %123 = vmatpush2.msra.mxu0 0.0
    %124 = vmatprep.subr.mxu0 0.0
    %125 = vmatpush2.msra.mxu0 0.0
    %126 = vmatprep.subr.mxu0 0.0
    %127 = vmatpush2.msra.mxu0 0.0
    %128 = vmatprep.subr.mxu0 0.0
    %129 = vmatpush2.msra.mxu0 0.0
    %130 = vmatprep.mubr.f32.mxu0 0.0
    %131 = vmatmul.mubr.f32.gmra.mxu0 %v60
    %v132 = vpop.f32.mrf.mxu0
    %v133 = vadd.f32 %v57, %v132
    %v134 = vpop.f32.mrf.mxu0
    %135 = vdwg.mxu0
    %v136 = vmax.f32 %v133, 0.0
    %v137 = vlaneseq
    %v138 = vshrl.u32 %v137, 7
    %v139 = vsub.s32 0, %v138
    %v140 = vrot.slane %v44, %v139
    %v142 = vsel %vm58, %v136, 0
    %v145 = vsel %vm62, %v43, 0
    %147 = vmatprep.subr.mxu0 0.0
    %148 = vmatpush1.msra.mxu0 0.0
    %149 = vmatprep.subr.mxu0 0.0
    %150 = vmatpush1.msra.mxu0 0.0
    %151 = vmatprep.subr.mxu0 0.0
    %152 = vmatpush1.msra.mxu0 0.0
    %153 = vmatprep.subr.mxu0 0.0
    %154 = vmatpush1.msra.mxu0 0.0
    %155 = vmatprep.subr.mxu0 0.0
    %156 = vmatpush1.msra.mxu0 0.0
    %157 = vmatprep.subr.mxu0 0.0
    %158 = vmatpush1.msra.mxu0 0.0
    %159 = vmatprep.subr.mxu0 0.0
    %160 = vmatpush1.msra.mxu0 0.0
    %161 = vmatprep.subr.mxu0 0.0
    %162 = vmatpush1.msra.mxu0 0.0
    %163 = vmatprep.subr.mxu0 0.0
    %164 = vmatpush1.msra.mxu0 0.0
    %165 = vmatprep.subr.mxu0 0.0
    %166 = vmatpush1.msra.mxu0 0.0
    %167 = vmatprep.subr.mxu0 0.0
    %168 = vmatpush1.msra.mxu0 0.0
    %169 = vmatprep.subr.mxu0 0.0
    %170 = vmatpush1.msra.mxu0 0.0
    %171 = vmatprep.subr.mxu0 0.0
    %172 = vmatpush1.msra.mxu0 0.0
    %173 = vmatprep.subr.mxu0 0.0
    %174 = vmatpush1.msra.mxu0 0.0
    %175 = vmatprep.subr.mxu0 0.0
    %176 = vmatpush1.msra.mxu0 %v145
    %177 = vmatprep.subr.mxu0 0.0
    %178 = vmatpush1.msra.mxu0 %v42
    %179 = vmatprep.subr.mxu0 0.0
    %180 = vmatpush2.msra.mxu0 0.0
    %181 = vmatprep.subr.mxu0 0.0
    %182 = vmatpush2.msra.mxu0 0.0
    %183 = vmatprep.subr.mxu0 0.0
    %184 = vmatpush2.msra.mxu0 0.0
    %185 = vmatprep.subr.mxu0 0.0
    %186 = vmatpush2.msra.mxu0 0.0
    %187 = vmatprep.subr.mxu0 0.0
    %188 = vmatpush2.msra.mxu0 0.0
    %189 = vmatprep.subr.mxu0 0.0
    %190 = vmatpush2.msra.mxu0 0.0
    %191 = vmatprep.subr.mxu0 0.0
    %192 = vmatpush2.msra.mxu0 0.0
    %193 = vmatprep.subr.mxu0 0.0
    %194 = vmatpush2.msra.mxu0 0.0
    %195 = vmatprep.subr.mxu0 0.0
    %196 = vmatpush2.msra.mxu0 0.0
    %197 = vmatprep.subr.mxu0 0.0
    %198 = vmatpush2.msra.mxu0 0.0
    %199 = vmatprep.subr.mxu0 0.0
    %200 = vmatpush2.msra.mxu0 0.0
    %201 = vmatprep.subr.mxu0 0.0
    %202 = vmatpush2.msra.mxu0 0.0
    %203 = vmatprep.subr.mxu0 0.0
    %204 = vmatpush2.msra.mxu0 0.0
    %205 = vmatprep.subr.mxu0 0.0
    %206 = vmatpush2.msra.mxu0 0.0
    %207 = vmatprep.subr.mxu0 0.0
    %208 = vmatpush2.msra.mxu0 0.0
    %209 = vmatprep.subr.mxu0 0.0
    %210 = vmatpush2.msra.mxu0 0.0
    %211 = vmatprep.mubr.f32.mxu0 0.0
    %212 = vmatmul.mubr.f32.gmra.mxu0 %v142
    %v213 = vpop.f32.mrf.mxu0
    %v214 = vadd.f32 %v140, %v213
    %v215 = vpop.f32.mrf.mxu0
    %216 = vdwg.mxu0
    %v217 = vmax.f32 %v214, 0.0
    %v218 = vlaneseq
    %v219 = vshrl.u32 %v218, 7
    %v220 = vsub.s32 0, %v219
    %v221 = vrot.slane %v53, %v220
    %vm222 = vcmask 490496
    %v224 = vsel %vm222, %v217, 0
    %vm226 = vcmask 1043456
    %v228 = vsel %vm226, %v52, 0
    %230 = vmatprep.subr.mxu0 0.0
    %231 = vmatpush1.msra.mxu0 0.0
    %232 = vmatprep.subr.mxu0 0.0
    %233 = vmatpush1.msra.mxu0 0.0
    %234 = vmatprep.subr.mxu0 0.0
    %235 = vmatpush1.msra.mxu0 0.0
    %236 = vmatprep.subr.mxu0 0.0
    %237 = vmatpush1.msra.mxu0 0.0
    %238 = vmatprep.subr.mxu0 0.0
    %239 = vmatpush1.msra.mxu0 0.0
    %240 = vmatprep.subr.mxu0 0.0
    %241 = vmatpush1.msra.mxu0 0.0
    %242 = vmatprep.subr.mxu0 0.0
    %243 = vmatpush1.msra.mxu0 0.0
    %244 = vmatprep.subr.mxu0 0.0
    %245 = vmatpush1.msra.mxu0 0.0
    %246 = vmatprep.subr.mxu0 0.0
    %247 = vmatpush1.msra.mxu0 %v228
    %248 = vmatprep.subr.mxu0 0.0
    %249 = vmatpush1.msra.mxu0 %v51
    %250 = vmatprep.subr.mxu0 0.0
    %251 = vmatpush1.msra.mxu0 %v50
    %252 = vmatprep.subr.mxu0 0.0
    %253 = vmatpush1.msra.mxu0 %v49
    %254 = vmatprep.subr.mxu0 0.0
    %255 = vmatpush1.msra.mxu0 %v48
    %256 = vmatprep.subr.mxu0 0.0
    %257 = vmatpush1.msra.mxu0 %v47
    %258 = vmatprep.subr.mxu0 0.0
    %259 = vmatpush1.msra.mxu0 %v46
    %260 = vmatprep.subr.mxu0 0.0
    %261 = vmatpush1.msra.mxu0 %v45
    %262 = vmatprep.subr.mxu0 0.0
    %263 = vmatpush2.msra.mxu0 0.0
    %264 = vmatprep.subr.mxu0 0.0
    %265 = vmatpush2.msra.mxu0 0.0
    %266 = vmatprep.subr.mxu0 0.0
    %267 = vmatpush2.msra.mxu0 0.0
    %268 = vmatprep.subr.mxu0 0.0
    %269 = vmatpush2.msra.mxu0 0.0
    %270 = vmatprep.subr.mxu0 0.0
    %271 = vmatpush2.msra.mxu0 0.0
    %272 = vmatprep.subr.mxu0 0.0
    %273 = vmatpush2.msra.mxu0 0.0
    %274 = vmatprep.subr.mxu0 0.0
    %275 = vmatpush2.msra.mxu0 0.0
    %276 = vmatprep.subr.mxu0 0.0
    %277 = vmatpush2.msra.mxu0 0.0
    %278 = vmatprep.subr.mxu0 0.0
    %279 = vmatpush2.msra.mxu0 0.0
    %280 = vmatprep.subr.mxu0 0.0
    %281 = vmatpush2.msra.mxu0 0.0
    %282 = vmatprep.subr.mxu0 0.0
    %283 = vmatpush2.msra.mxu0 0.0
    %284 = vmatprep.subr.mxu0 0.0
    %285 = vmatpush2.msra.mxu0 0.0
    %286 = vmatprep.subr.mxu0 0.0
    %287 = vmatpush2.msra.mxu0 0.0
    %288 = vmatprep.subr.mxu0 0.0
    %289 = vmatpush2.msra.mxu0 0.0
    %290 = vmatprep.subr.mxu0 0.0
    %291 = vmatpush2.msra.mxu0 0.0
    %292 = vmatprep.subr.mxu0 0.0
    %293 = vmatpush2.msra.mxu0 0.0
    %294 = vmatprep.mubr.f32.mxu0 0.0
    %295 = vmatmul.mubr.f32.gmra.mxu0 %v224
    %v296 = vpop.f32.mrf.mxu0
    %v297 = vadd.f32 %v221, %v296
    %v298 = vpop.f32.mrf.mxu0
    %299 = vdwg.mxu0
    %300 = vrot.lane.b32.xlu0 %v297, 123
    %v301 = vpop.permute.xlu0 %300
    %v302 = vmax.f32 %v297, %v301
    %v303 = vlaneseq
    %v304 = vand.u32 %v303, 127
    %vm305 = vcmp.lt.s32.totalorder %v304, 60
    %v306 = vsel %vm305, 1, 0
    %vm307 = vcmp.eq.s32.totalorder %v306, 1
    %v308 = vsel %vm307, %v297, %v302
    %vm309 = vcmask 531456
    %310 = vst.msk [vmem:[#allocation7] sm:$0xff] %vm309, %v308
    // Predicated region
    $region18: #{my_model_forward.1} parent=1 // pred_check
      _
    $region19: #{my_model_forward.1} parent=1 // pred_check_branch
      %312 = sbr.rel (0) target = $region21
    $region20: #{my_model_forward.1} parent=1 // pred_region
      %s314 = ssub.s32 128, 128
      %315 = vsyncadd [#allocation4], %s314
      %s317 = sshll.u32 [#allocation7], 4
      %s318 = int_to_ptr.vmem [resolvable:$true] %s317
      %320 = dma.vmem_to_hbm [thread:$0]  %s318, 128, %s2, [#allocation4]
    $region21: #{my_model_forward.1} parent=1 // pred_fallthru
      _
    // Predicated region
    $region22: #{my_model_forward.1} parent=1 // pred_check
      _
    $region23: #{my_model_forward.1} parent=1 // pred_check_branch
      %322 = sbr.rel (0) target = $region25
    $region24: #{my_model_forward.1} parent=1 // pred_region
      %323 = dma.done [#allocation4], 128
    $region25: #{my_model_forward.1} parent=1 // pred_fallthru
      _
    %324 = vsyncpa [#allocation3], 1
    %325 = vsyncpa [#allocation6], 1
    %326 = vsyncpa [#allocation4], 1

</llo_original>
